<compile_context>
chip_gen: v5e
topology: v5e:2x2
jax: 0.10.0
libtpu: 0.0.40
codegen_flags: <defaults>
</compile_context>

<pallas_src>
import jax
import jax.numpy as jnp
from jax import lax
from jax.experimental import pallas as pl
from jax.experimental.pallas import tpu as pltpu


def _linear_t_kernel(x_ref, w_ref, b_ref, o_ref):
    # x_ref: (tn, K)   w_ref: (OF, K)   b_ref: (OF, 1)   o_ref: (OF, tn)
    # Contract on the channel axis (last dim of both) -> transposed output so
    # the store lane dim is the big batch tile (unmasked vst).
    acc = lax.dot_general(
        w_ref[...], x_ref[...],
        dimension_numbers=(((1,), (1,)), ((), ())),
        preferred_element_type=jnp.float32,
    )
    o_ref[...] = (acc + b_ref[...]).astype(o_ref.dtype)


def _pick_tile_rows(nrows, max_tile):
    # Small inputs: one full block (block == full dim sidesteps the (8,128)
    # divisibility rule). Large inputs: multiple-of-256 tiles, and at least
    # two tiles so v7x's megacore has work for both TensorCores.
    if nrows <= 1024:
        return nrows
    tile = min(max_tile, pl.cdiv(nrows, 2))
    tile = ((tile + 255) // 256) * 256
    return min(tile, max_tile)


def _pallas_linear(x, weight, bias, *, max_tile_rows=16384, compute_dtype=None):
    """x: (B, C); weight: (O, C) (PyTorch layout); bias: (O,). Returns (B, O) f32."""
    B, C = x.shape
    O = weight.shape[0]

    # Lane-dense fold: pack 4 batch rows into one 128-lane row when possible.
    # TODO(synk): pad at most fold-1 rows (not the whole batch) if batches that
    # are not multiples of 4 ever dominate; for now fall back to the unfolded path.
    fold = 4 if (B % 4 == 0 and B >= 4) else 1
    nrows = B // fold
    K = fold * C
    OF = fold * O

    x_in = x.reshape(nrows, K)  # pure metadata reshape (row-major contiguous)
    if fold > 1:
        # Block-diagonal weight: (OF, K) with `fold` copies of W on the diagonal.
        w_in = jnp.kron(jnp.eye(fold, dtype=weight.dtype), weight)
        b_in = jnp.tile(bias, fold).reshape(OF, 1)
    else:
        w_in = weight
        b_in = bias.reshape(OF, 1)

    if compute_dtype is not None:
        # bf16 inputs, f32 accumulation (preferred_element_type) in the kernel.
        x_in = x_in.astype(compute_dtype)
        w_in = w_in.astype(compute_dtype)

    tn = _pick_tile_rows(nrows, max_tile_rows)
    grid = (pl.cdiv(nrows, tn),)   # ragged last block handled by Pallas masking

    bytes_accessed = (
        x_in.size * x_in.dtype.itemsize
        + w_in.size * w_in.dtype.itemsize
        + b_in.size * b_in.dtype.itemsize
        + nrows * OF * 4
    )

    out_t = pl.pallas_call(
        _linear_t_kernel,
        out_shape=jax.ShapeDtypeStruct((OF, nrows), jnp.float32),
        grid=grid,
        in_specs=[
            pl.BlockSpec((tn, K), lambda i: (i, 0)),   # stream x over batch
            pl.BlockSpec((OF, K), lambda i: (0, 0)),   # weight resident
            pl.BlockSpec((OF, 1), lambda i: (0, 0)),   # bias resident
        ],
        out_specs=pl.BlockSpec((OF, tn), lambda i: (0, i)),  # lane-dense stores
        compiler_params=pltpu.CompilerParams(
            dimension_semantics=("parallel",),          # independent batch tiles
            vmem_limit_bytes=32 * 1024 * 1024,          # double-buffered 8 MiB tiles
        ),
        cost_estimate=pl.CostEstimate(
            flops=2 * B * C * O,
            transcendentals=0,
            bytes_accessed=bytes_accessed,
        ),
    )(x_in, w_in, b_in)

    # (OF, nrows) -> (nrows, OF) -> (B, O); tiny (B*O elements) glue outside.
    return out_t.T.reshape(B, O)


def survival_classifier_forward(x, weight, bias, mode="classification",
                                compute_dtype=None):
    """Matches SurvivalClassifier.forward with droprate == 0.0.

    classification: weight (2, C), bias (2,) -> {'logits': (B, 2)}
    regression:     weight (1, C), bias (1,) -> {'risk_score': (B, 1)}
    """
    # TODO(synk): stochastic dropout via pltpu.prng_random_bits if a nonzero
    # droprate is ever needed (module default is 0.0 -> identity).
    out = _pallas_linear(x, weight, bias, compute_dtype=compute_dtype)
    if mode == "classification":
        return {"logits": out}
    return {"risk_score": out}


def _init_linear_params(key, in_features, out_features):
    # Deterministic init mimicking nn.Linear default: U(-1/sqrt(in), 1/sqrt(in))
    kw, kb = jax.random.split(key)
    bound = 1.0 / jnp.sqrt(jnp.float32(in_features))
    weight = jax.random.uniform(
        kw, (out_features, in_features), jnp.float32, -bound, bound)
    bias = jax.random.uniform(
        kb, (out_features,), jnp.float32, -bound, bound)
    return weight, bias


if __name__ == "__main__":
    key = jax.random.PRNGKey(0)
    kx, kp, kx2, kp2 = jax.random.split(key, 4)

    # Classification mode: nn.Linear(n_channels, 2), B divisible by 4 (fold path).
    batch, n_channels = 8, 32
    x = jax.random.normal(kx, (batch, n_channels), jnp.float32)
    weight, bias = _init_linear_params(kp, n_channels, 2)

    out = survival_classifier_forward(x, weight, bias, mode="classification")
    logits = jax.block_until_ready(out["logits"])
    ref = x @ weight.T + bias
    assert logits.shape == (batch, 2)
    assert jnp.allclose(logits, ref, atol=1e-5, rtol=1e-5)

    # bf16-input option (f32 accumulation): halves HBM traffic; looser tolerance.
    out_bf16 = survival_classifier_forward(
        x, weight, bias, mode="classification", compute_dtype=jnp.bfloat16)
    logits_bf16 = jax.block_until_ready(out_bf16["logits"])
    assert jnp.allclose(logits_bf16, ref, atol=3e-2, rtol=3e-2)

    # Regression mode (n_out=1), batch not divisible by 4 -> unfolded fallback path.
    batch2 = 6
    x2 = jax.random.normal(kx2, (batch2, n_channels), jnp.float32)
    w2, b2 = _init_linear_params(kp2, n_channels, 1)
    out2 = survival_classifier_forward(x2, w2, b2, mode="regression")
    risk = jax.block_until_ready(out2["risk_score"])
    ref2 = x2 @ w2.T + b2
    assert risk.shape == (batch2, 1)
    assert jnp.allclose(risk, ref2, atol=1e-5, rtol=1e-5)

    print("KERNEL_OK")
</pallas_src>

<mosaic_0001>
module attributes {stable_mosaic.version = 11 : i64} {
  func.func @_linear_t_kernel(%arg0: i32, %arg1: memref<2x128xf32, #tpu.memory_space<vmem>>, %arg2: memref<8x128xf32, #tpu.memory_space<vmem>>, %arg3: memref<8x1xf32, #tpu.memory_space<vmem>>, %arg4: memref<8x2xf32, #tpu.memory_space<vmem>>) attributes {dimension_semantics = [#tpu.dimension_semantics<parallel>], iteration_bounds = array<i64: 1>, scalar_prefetch = 0 : i64, scratch_operands = 0 : i64, tpu.core_type = #tpu.core_type<tc>, window_params = [{transform_indices = @transform_0, window_bounds = array<i64: 2, 128>}, {pipeline_mode = #tpu.pipeline_mode<synchronous>, transform_indices = @transform_1, window_bounds = array<i64: 8, 128>}, {pipeline_mode = #tpu.pipeline_mode<synchronous>, transform_indices = @transform_2, window_bounds = array<i64: 8, 1>}, {transform_indices = @transform_3, window_bounds = array<i64: 8, 2>}]} {
    %c0 = arith.constant 0 : index
    %c0_0 = arith.constant 0 : index
    %0 = vector.load %arg2[%c0, %c0_0] : memref<8x128xf32, #tpu.memory_space<vmem>>, vector<8x128xf32>
    %c0_1 = arith.constant 0 : index
    %c0_2 = arith.constant 0 : index
    %1 = vector.load %arg1[%c0_1, %c0_2] : memref<2x128xf32, #tpu.memory_space<vmem>>, vector<2x128xf32>
    %cst = arith.constant dense<0.000000e+00> : vector<8x2xf32>
    %2 = tpu.matmul %0, %1, %cst {dimension_numbers = #tpu.dot_dimension_numbers<[1], [1], [0], [0], [0, 0, 1, 0], [], []>} : vector<8x128xf32>, vector<2x128xf32>, vector<8x2xf32> -> vector<8x2xf32>
    %c0_3 = arith.constant 0 : index
    %c0_4 = arith.constant 0 : index
    %3 = vector.load %arg3[%c0_3, %c0_4] : memref<8x1xf32, #tpu.memory_space<vmem>>, vector<8x1xf32>
    %4 = vector.broadcast %3 : vector<8x1xf32> to vector<8x2xf32>
    %5 = arith.addf %2, %4 : vector<8x2xf32>
    %c0_5 = arith.constant 0 : index
    %c0_6 = arith.constant 0 : index
    %6 = vector.load %arg4[%c0_5, %c0_6] : memref<8x2xf32, #tpu.memory_space<vmem>>, vector<8x2xf32>
    tpu.vector_store %arg4[%c0_5, %c0_6], %5 {strides = array<i32>} : memref<8x2xf32, #tpu.memory_space<vmem>>, vector<8x2xf32>,
    return
  }
  func.func @transform_0(%arg0: i32) -> (i32, i32) {
    %c0_i32 = arith.constant 0 : i32
    %c0_i32_0 = arith.constant 0 : i32
    return %arg0, %c0_i32 : i32, i32
  }
  func.func @transform_1(%arg0: i32) -> (i32, i32) {
    %c0_i32 = arith.constant 0 : i32
    %c0_i32_0 = arith.constant 0 : i32
    %c0_i32_1 = arith.constant 0 : i32
    return %c0_i32, %c0_i32_0 : i32, i32
  }
  func.func @transform_2(%arg0: i32) -> (i32, i32) {
    %c0_i32 = arith.constant 0 : i32
    %c0_i32_0 = arith.constant 0 : i32
    %c0_i32_1 = arith.constant 0 : i32
    return %c0_i32, %c0_i32_0 : i32, i32
  }
  func.func @transform_3(%arg0: i32) -> (i32, i32) {
    %c0_i32 = arith.constant 0 : i32
    %c0_i32_0 = arith.constant 0 : i32
    return %c0_i32, %arg0 : i32, i32
  }
}

</mosaic_0001>

<llo_original>
// kernel: tpu_custom_call.1
$region0: #{tpu_custom_call.1}
  #allocation0 [shape = 'u32[]', space=smem, size = 0x4, offset = 0x4, fixed_abs, tag = 'smem constant byte address 0x4 - core index']
  #allocation1 [shape = 'u32[72,128]{1,0:T(1,128)}', space=vmem, size = 0x9000, scoped, tag = 'internal scratch']
  %s0 = inlined_call_operand.hbm [shape: f32[2,128], index: 0, kind: input, shape index: {}]
  %s1 = inlined_call_operand.vmem [shape: f32[8,128], index: 1, kind: input, shape index: {}]
  %s2 = inlined_call_operand.vmem [shape: f32[8,1], index: 2, kind: input, shape index: {}]
  %s3 = inlined_call_operand.vmem [shape: f32[8,2], index: 3, kind: output, shape index: {}]
  %s4 = sld [smem:[#allocation0]]
  $region26: #{tpu_custom_call.1} parent=0
    _
  %s6 = ssub.s32 1, %s4
  %s7 = scalar_select 0, %s6, %s4
  $region1: #{tpu_custom_call.1} parent=0
    #allocation2 [shape = 'u8[1024]{0}', space=vmem, size = 0x400, scoped, tag = 'input window, operand 0, single buffered']
    #allocation3 [shape = 's32[1]{0}', space=sflag, size = 0x4, scoped, tag = 'scoped memory for tpu_custom_call.1']
    %8 = vsyncpa [#allocation3], 0
    // Predicated region
    $region2: #{tpu_custom_call.1} parent=1 // pred_check
      _
    $region3: #{tpu_custom_call.1} parent=1 // pred_check_branch
      %10 = sbr.rel (0) target = $region5
    $region4: #{tpu_custom_call.1} parent=1 // pred_region
      %12 = vsyncadd [#allocation3], 0
      %s14 = sshll.u32 %s0, 4
      %s15 = int_to_ptr.hbm [resolvable:$true] %s14
      %s16 = sshll.u32 [#allocation2], 4
      %s17 = int_to_ptr.vmem [resolvable:$true] %s16
      %19 = dma.hbm_to_vmem [thread:$0]  %s15, 32, %s17, [#allocation3]
    $region5: #{tpu_custom_call.1} parent=1 // pred_fallthru
      _
    // Predicated region
    $region6: #{tpu_custom_call.1} parent=1 // pred_check
      _
    $region7: #{tpu_custom_call.1} parent=1 // pred_check_branch
      %21 = sbr.rel (0) target = $region9
    $region8: #{tpu_custom_call.1} parent=1 // pred_region
      _
    $region9: #{tpu_custom_call.1} parent=1 // pred_fallthru
      _
    // Predicated region
    $region10: #{tpu_custom_call.1} parent=1 // pred_check
      _
    $region11: #{tpu_custom_call.1} parent=1 // pred_check_branch
      %23 = sbr.rel (0) target = $region13
    $region12: #{tpu_custom_call.1} parent=1 // pred_region
      _
    $region13: #{tpu_custom_call.1} parent=1 // pred_fallthru
      _
    // Predicated region
    $region14: #{tpu_custom_call.1} parent=1 // pred_check
      _
    $region15: #{tpu_custom_call.1} parent=1 // pred_check_branch
      %25 = sbr.rel (0) target = $region17
    $region16: #{tpu_custom_call.1} parent=1 // pred_region
      %27 = dma.done [#allocation3], 32
    $region17: #{tpu_custom_call.1} parent=1 // pred_fallthru
      _
    %v28 = vld [vmem:[%s1] sm:$0xff]
    %v29 = vld [vmem:[#allocation2] sm:$0x3]
    %v30 = vld [vmem:[%s2] sm:$0xff]
    %32 = vset.pattern.permute.xlu0 0
    %33 = vperm.xlu0 %32, %v30
    %v34 = vpop.permute.xlu0 %33
    %36 = vmatpush.xpose.msra.mxu0 0.0
    %37 = vmatpush.xpose.msra.mxu0 0.0
    %38 = vmatpush.xpose.msra.mxu0 0.0
    %39 = vmatpush.xpose.msra.mxu0 0.0
    %40 = vmatpush.xpose.msra.mxu0 0.0
    %41 = vmatpush.xpose.msra.mxu0 0.0
    %42 = vmatpush.xpose.msra.mxu0 0.0
    %43 = vmatpush.xpose.msra.mxu0 0.0
    %44 = vmatpush.xpose.msra.mxu0 0.0
    %45 = vmatpush.xpose.msra.mxu0 0.0
    %46 = vmatpush.xpose.msra.mxu0 0.0
    %47 = vmatpush.xpose.msra.mxu0 0.0
    %48 = vmatpush.xpose.msra.mxu0 0.0
    %49 = vmatpush.xpose.msra.mxu0 0.0
    %50 = vmatpush.xpose.msra.mxu0 0.0
    %51 = vmatpush.xpose.msra.mxu0 %v29
    %52 = vmatmul.f32.gmra.mxu0 %v28
    %v53 = vpop.f32.mrf.mxu0
    %v54 = vadd.f32 %v34, %v53
    %55 = vdwg.mxu0
    %vm56 = vcmask 15360
    %57 = vst.msk [vmem:[%s3] sm:$0xff] %vm56, %v54
    // Predicated region
    $region18: #{tpu_custom_call.1} parent=1 // pred_check
      _
    $region19: #{tpu_custom_call.1} parent=1 // pred_check_branch
      %59 = sbr.rel (0) target = $region21
    $region20: #{tpu_custom_call.1} parent=1 // pred_region
      _
    $region21: #{tpu_custom_call.1} parent=1 // pred_fallthru
      _
    // Predicated region
    $region22: #{tpu_custom_call.1} parent=1 // pred_check
      _
    $region23: #{tpu_custom_call.1} parent=1 // pred_check_branch
      %61 = sbr.rel (0) target = $region25
    $region24: #{tpu_custom_call.1} parent=1 // pred_region
      _
    $region25: #{tpu_custom_call.1} parent=1 // pred_fallthru
      _
    %62 = vsyncpa [#allocation3], 1

</llo_original>
